<compile_context>
chip_gen: v7x
topology: tpu7x:2x2x1
jax: 0.10.0
libtpu: 0.0.40
codegen_flags: <defaults>
</compile_context>

<pallas_src>
import math

import jax
import jax.numpy as jnp
from jax import lax
from jax.experimental import pallas as pl
from jax.experimental.pallas import tpu as pltpu


def _round_up(x, m):
    return ((x + m - 1) // m) * m


def _hann_window(win_length):
    # torch.hann_window(win_length), periodic=True
    n = jnp.arange(win_length, dtype=jnp.float32)
    return 0.5 * (1.0 - jnp.cos(2.0 * jnp.pi * n / win_length))


def _melscale_fbanks(n_freqs, f_min, f_max, n_mels, sample_rate):
    # torchaudio.functional.melscale_fbanks, mel_scale="htk", norm=None
    all_freqs = jnp.linspace(0.0, float(sample_rate // 2), n_freqs)
    m_min = 2595.0 * math.log10(1.0 + f_min / 700.0)
    m_max = 2595.0 * math.log10(1.0 + f_max / 700.0)
    m_pts = jnp.linspace(m_min, m_max, n_mels + 2)
    f_pts = 700.0 * (10.0 ** (m_pts / 2595.0) - 1.0)
    f_diff = f_pts[1:] - f_pts[:-1]                       # (n_mels + 1,)
    slopes = f_pts[None, :] - all_freqs[:, None]          # (n_freqs, n_mels + 2)
    down_slopes = (-1.0 * slopes[:, :-2]) / f_diff[:-1]
    up_slopes = slopes[:, 2:] / f_diff[1:]
    fb = jnp.maximum(0.0, jnp.minimum(down_slopes, up_slopes))
    return fb.astype(jnp.float32)                         # (n_freqs, n_mels)


def log_mel_spec(x, *, sample_rate=8000, n_mels=128, win_length=160,
                 hop_length=80, n_fft=400):
    """LogMelSpec forward. x: (B, L) float32 waveform -> (B, n_mels, frames)."""
    x = x.astype(jnp.float32)
    B, L = x.shape
    n_freqs = n_fft // 2 + 1
    pad = n_fft // 2                       # 200 (requires L > 200, as in torch)
    offset = (n_fft - win_length) // 2     # 120: hann window centered in n_fft frame

    NFP = _round_up(n_freqs, 128)          # 201 -> 256 (freq axis, lane-aligned)
    MP = _round_up(n_mels, 128)            # 128 -> 128 (mel axis)

    # ---- trace-time constants: fused window-folded DFT matrix + mel filterbank ----
    window = _hann_window(win_length)
    m = jnp.arange(win_length, dtype=jnp.float32)
    k = jnp.arange(n_freqs, dtype=jnp.float32)
    phase = (2.0 * jnp.pi / n_fft) * (m[:, None] + offset) * k[None, :]
    cosw = window[:, None] * jnp.cos(phase)            # (win_length, n_freqs)
    sinw = window[:, None] * jnp.sin(phase)
    cossin = jnp.concatenate(
        [jnp.pad(cosw, ((0, 0), (0, NFP - n_freqs))),
         jnp.pad(sinw, ((0, 0), (0, NFP - n_freqs)))],
        axis=1).astype(jnp.bfloat16)                   # (win_length, 2*NFP) bf16

    fb = _melscale_fbanks(n_freqs, 0.0, float(sample_rate // 2), n_mels, sample_rate)
    fbt = jnp.pad(fb, ((0, NFP - n_freqs), (0, MP - n_mels))).T  # (MP, NFP) f32

    # ---- framing: reflect pad + hop-block relayout (no gather) ----
    xp = jnp.pad(x, ((0, 0), (pad, pad)), mode="reflect")
    num_frames = 1 + L // hop_length
    if win_length == 2 * hop_length:
        # frame t covers xp[offset + t*hop : offset + t*hop + win] = two hop blocks
        n_blocks = num_frames + 1
        blocks = xp[:, offset:offset + n_blocks * hop_length]
        blocks = blocks.reshape(B, n_blocks, hop_length)
        frames = jnp.concatenate([blocks[:, :-1, :], blocks[:, 1:, :]], axis=-1)
    else:  # generic fallback (gather); not hit with the module defaults
        starts = jnp.arange(num_frames) * hop_length + offset
        idx = starts[:, None] + jnp.arange(win_length)[None, :]
        frames = xp[:, idx]                             # (B, num_frames, win_length)

    # ---- tiling: frame blocks, multiples of 128, >=2 grid steps where possible ----
    tf_block = min(1024, _round_up(-(-num_frames // 2), 128))
    nf_padded = _round_up(num_frames, tf_block)
    frames_p = jnp.pad(
        frames, ((0, 0), (0, nf_padded - num_frames), (0, 0))).astype(jnp.bfloat16)

    def kernel(frames_ref, cossin_ref, fbt_ref, o_ref):
        # frames_ref: (1, TFB, win_length) bf16 ; cossin_ref: (win_length, 2*NFP) bf16
        # fbt_ref: (MP, NFP) f32 ; o_ref: (1, MP, TFB) f32 (output already transposed)
        f = frames_ref[0]                                              # (TFB, K)
        reim = jnp.dot(f, cossin_ref[...],
                       preferred_element_type=jnp.float32)             # (TFB, 2*NFP)
        re = reim[:, :NFP]
        im = reim[:, NFP:]
        power = re * re + im * im                                      # |X[k]|^2, f32
        # mel^T = fb^T · power^T : A·Bᵀ contraction on the shared freq (lane) axis.
        mel_t = lax.dot_general(fbt_ref[...], power,
                                dimension_numbers=(((1,), (1,)), ((), ())),
                                preferred_element_type=jnp.float32)    # (MP, TFB)
        o_ref[0] = jnp.log(mel_t + 1e-14)

    out = pl.pallas_call(
        kernel,
        out_shape=jax.ShapeDtypeStruct((B, MP, nf_padded), jnp.float32),
        grid_spec=pltpu.PrefetchScalarGridSpec(
            num_scalar_prefetch=0,
            grid=(B, nf_padded // tf_block),
            in_specs=[
                pl.BlockSpec((1, tf_block, win_length), lambda b, i: (b, i, 0)),
                pl.BlockSpec((win_length, 2 * NFP), lambda b, i: (0, 0)),
                pl.BlockSpec((MP, NFP), lambda b, i: (0, 0)),
            ],
            out_specs=pl.BlockSpec((1, MP, tf_block), lambda b, i: (b, 0, i)),
        ),
        compiler_params=pltpu.CompilerParams(
            dimension_semantics=("parallel", "parallel"),
        ),
    )(frames_p, cossin, fbt)

    # Output is already (B, n_mels, frames)-oriented: just trim the padding.
    return out[:, :n_mels, :num_frames]


if __name__ == "__main__":
    key = jax.random.PRNGKey(0)

    # Two 0.1 s utterances at 8 kHz (small, consistent with the module defaults).
    B, L = 2, 800
    x = jax.random.normal(key, (B, L), dtype=jnp.float32)

    y = jax.jit(log_mel_spec)(x)
    y = jax.block_until_ready(y)

    num_frames = 1 + L // 80            # center=True framing
    assert y.shape == (B, 128, num_frames), y.shape
    assert y.dtype == jnp.float32
    assert bool(jnp.all(jnp.isfinite(y)))
    print("KERNEL_OK")
</pallas_src>

<mosaic_0001>
module attributes {stable_mosaic.version = 11 : i64} {
  func.func @kernel(%arg0: i32, %arg1: i32, %arg2: memref<1x128x160xbf16, #tpu.memory_space<vmem>>, %arg3: memref<160x512xbf16, #tpu.memory_space<vmem>>, %arg4: memref<128x256xf32, #tpu.memory_space<vmem>>, %arg5: memref<1x128x128xf32, #tpu.memory_space<vmem>>) attributes {dimension_semantics = [#tpu.dimension_semantics<parallel>, #tpu.dimension_semantics<parallel>], iteration_bounds = array<i64: 2, 1>, scalar_prefetch = 0 : i64, scratch_operands = 0 : i64, tpu.core_type = #tpu.core_type<tc>, window_params = [{transform_indices = @transform_0, window_bounds = array<i64: 1, 128, 160>}, {pipeline_mode = #tpu.pipeline_mode<synchronous>, transform_indices = @transform_1, window_bounds = array<i64: 160, 512>}, {pipeline_mode = #tpu.pipeline_mode<synchronous>, transform_indices = @transform_2, window_bounds = array<i64: 128, 256>}, {transform_indices = @transform_3, window_bounds = array<i64: 1, 128, 128>}]} {
    %c0 = arith.constant 0 : index
    %c0_0 = arith.constant 0 : index
    %c0_1 = arith.constant 0 : index
    %0 = vector.load %arg2[%c0, %c0_0, %c0_1] : memref<1x128x160xbf16, #tpu.memory_space<vmem>>, vector<1x128x160xbf16>
    %1 = vector.shape_cast %0 : vector<1x128x160xbf16> to vector<128x160xbf16>
    %c0_2 = arith.constant 0 : index
    %c0_3 = arith.constant 0 : index
    %2 = vector.load %arg3[%c0_2, %c0_3] : memref<160x512xbf16, #tpu.memory_space<vmem>>, vector<160x512xbf16>
    %cst = arith.constant dense<0.000000e+00> : vector<128x512xf32>
    %3 = tpu.matmul %1, %2, %cst {dimension_numbers = #tpu.dot_dimension_numbers<[1], [0], [0], [1], [0, 0, 1, 1], [], []>} : vector<128x160xbf16>, vector<160x512xbf16>, vector<128x512xf32> -> vector<128x512xf32>
    %4 = vector.extract_strided_slice %3 {offsets = [0, 0], sizes = [128, 256], strides = [1, 1]} : vector<128x512xf32> to vector<128x256xf32>
    %5 = vector.extract_strided_slice %3 {offsets = [0, 256], sizes = [128, 256], strides = [1, 1]} : vector<128x512xf32> to vector<128x256xf32>
    %6 = arith.mulf %4, %4 : vector<128x256xf32>
    %7 = arith.mulf %5, %5 : vector<128x256xf32>
    %8 = arith.addf %6, %7 : vector<128x256xf32>
    %c0_4 = arith.constant 0 : index
    %c0_5 = arith.constant 0 : index
    %9 = vector.load %arg4[%c0_4, %c0_5] : memref<128x256xf32, #tpu.memory_space<vmem>>, vector<128x256xf32>
    %cst_6 = arith.constant dense<0.000000e+00> : vector<128x128xf32>
    %10 = tpu.matmul %9, %8, %cst_6 {dimension_numbers = #tpu.dot_dimension_numbers<[1], [1], [0], [0], [0, 0, 1, 0], [], []>} : vector<128x256xf32>, vector<128x256xf32>, vector<128x128xf32> -> vector<128x128xf32>
    %cst_7 = arith.constant 9.99999982E-15 : f32
    %11 = vector.broadcast %cst_7 : f32 to vector<128x128xf32>
    %12 = arith.addf %10, %11 : vector<128x128xf32>
    %13 = math.log %12 : vector<128x128xf32>
    %c0_8 = arith.constant 0 : index
    %c0_9 = arith.constant 0 : index
    %c0_10 = arith.constant 0 : index
    %14 = vector.load %arg5[%c0_8, %c0_9, %c0_10] : memref<1x128x128xf32, #tpu.memory_space<vmem>>, vector<1x128x128xf32>
    %15 = vector.shape_cast %14 : vector<1x128x128xf32> to vector<128x128xf32>
    %16 = vector.shape_cast %13 : vector<128x128xf32> to vector<1x128x128xf32>
    tpu.vector_store %arg5[%c0_8, %c0_9, %c0_10], %16 {strides = array<i32>} : memref<1x128x128xf32, #tpu.memory_space<vmem>>, vector<1x128x128xf32>,
    return
  }
  func.func @transform_0(%arg0: i32, %arg1: i32) -> (i32, i32, i32) {
    %c0_i32 = arith.constant 0 : i32
    %c0_i32_0 = arith.constant 0 : i32
    return %arg0, %arg1, %c0_i32 : i32, i32, i32
  }
  func.func @transform_1(%arg0: i32, %arg1: i32) -> (i32, i32) {
    %c0_i32 = arith.constant 0 : i32
    %c0_i32_0 = arith.constant 0 : i32
    %c0_i32_1 = arith.constant 0 : i32
    return %c0_i32, %c0_i32_0 : i32, i32
  }
  func.func @transform_2(%arg0: i32, %arg1: i32) -> (i32, i32) {
    %c0_i32 = arith.constant 0 : i32
    %c0_i32_0 = arith.constant 0 : i32
    %c0_i32_1 = arith.constant 0 : i32
    return %c0_i32, %c0_i32_0 : i32, i32
  }
  func.func @transform_3(%arg0: i32, %arg1: i32) -> (i32, i32, i32) {
    %c0_i32 = arith.constant 0 : i32
    %c0_i32_0 = arith.constant 0 : i32
    return %arg0, %c0_i32, %arg1 : i32, i32, i32
  }
}

</mosaic_0001>

<llo_original>
// kernel: reverse
$region0: #{reverse}
  %s0 = inlined_call_operand.vmem [shape: bf16[2,256], index: 0, kind: input, shape index: {}]
  %s1 = inlined_call_operand.vmem [shape: bf16[2,256], index: 1, kind: output, shape index: {}]
  %v2 = vlaneseq
  %v3 = vsub.s32 127, %v2
  %4 = vset.pattern.permute.xlu0 %v3
  $region1: #{reverse} parent=0
    #allocation0 [shape = 'u8[4096]{0}', space=vmem, size = 0x1000, scoped, tag = 'operand span for operand 0']
    #allocation1 [shape = 'u8[1024]{0}', space=vmem, size = 0x400, scoped, tag = 'packed  for operand 0']
    #allocation2 [shape = 'u8[4096]{0}', space=vmem, size = 0x1000, scoped, tag = 'operand span for operand 1']
    #allocation3 [shape = 'u8[1024]{0}', space=vmem, size = 0x400, scoped, tag = 'packed  for operand 1']
    loop: start=0, step=1, limit=4
    $region2: #{reverse} parent=1 // loop_pre_header
      _
    $region3: #{reverse} parent=1 // loop_header
      %s6 = sphi 0, %s10
      %p7 = scmp.ge.s32.totalorder %s6, 4
      %s13 = sphi 0, %s25
      %s14 = sphi 0, %s21
      %s15 = sphi 0, %s13
      %s16 = sphi 0, %s14
      %s17 = sphi 0, %s15
      %s18 = sphi 0, %s16
    $region4: #{reverse} parent=1 // loop_header_branch
      %9 = sbr.rel (%p7) target = $region8
    $region5: #{reverse} parent=1 // loop_body
      %s11 = ssub.s32 %s6, 1
      %s12 = ssub.s32 %s6, 2
      %s19 = sadd.s32 1, %s14
      %p20 = scmp.ge.s32.totalorder %s19, 2
      %s21 = scalar_select %p20, 0, %s19
      %s22 = sadd.s32 1, %s13
      %s23 = scalar_select %p20, %s22, %s13
      %p24 = scmp.ge.s32.totalorder %s23, 1
      %s25 = scalar_select %p24, 0, %s23
      %p26 = scmp.le.s32.totalorder 1, %s6
      %p27 = scmp.lt.s32.totalorder %s6, 3
      %p28 = pnand %p26, %p27
      %p29 = pneg %p28
      // Predicated region
      $region9: #{reverse} parent=5 // pred_check
        _
      $region10: #{reverse} parent=5 // pred_check_branch
        %31 = sbr.rel (%p28) target = $region12
      $region11: #{reverse} parent=5 // pred_region
        %s32 = ssub.s32 %s6, 1
      $region12: #{reverse} parent=5 // pred_fallthru
        _
      %p33 = scmp.lt.s32.totalorder %s6, 2
      // Predicated region
      $region13: #{reverse} parent=5 // pred_check
        %p34 = pneg %p33
      $region14: #{reverse} parent=5 // pred_check_branch
        %36 = sbr.rel (%p34) target = $region16
      $region15: #{reverse} parent=5 // pred_region
        %s37 = sand.u32 %s6, 1
        %s38 = sand.u32 %s6, 1
        %s39 = scalar_lea.vmem [#allocation1], %s38
        %s40 = ssub.s32 1, %s14
        %s41 = smul.addr %s13, 2
        %s42 = sadd.s32 %s40, %s41
        %s43 = scalar_lea.vmem %s0, %s42
        // Predicated region
        $region17: #{reverse} parent=15 // pred_check
          _
        $region18: #{reverse} parent=15 // pred_check_branch
          %45 = sbr.rel (0) target = $region20
        $region19: #{reverse} parent=15 // pred_region
          // Predicated region
          $region21: #{reverse} parent=19 // pred_check
            _
          $region22: #{reverse} parent=19 // pred_check_branch
            %47 = sbr.rel target = $region24
          $region23: #{reverse} parent=19 // pred_region
            // Predicated region
            $region36: #{reverse} parent=23 // pred_check
              _
            $region37: #{reverse} parent=23 // pred_check_branch
              %62 = sbr.rel (0) target = $region39
            $region38: #{reverse} parent=23 // pred_region
              loop: start=0, step=1, limit=1
              $region40: #{reverse} parent=38 // loop_pre_header
                _
              $region41: #{reverse} parent=38 // loop_header
                %s65 = sphi 0, %s69
                %p66 = scmp.ge.s32.totalorder %s65, 1
                %s70 = sphi %s43, %s43
                %s71 = sphi %s39, %s39
              $region42: #{reverse} parent=38 // loop_header_branch
                %68 = sbr.rel (%p66) target = $region46
              $region43: #{reverse} parent=38 // loop_body
                %v72 = vld [vmem:[%s70] sm:$0x1]
                %73 = vst [vmem:[%s71] sm:$0x1] %v72
              $region44: #{reverse} parent=38 // loop_footer
                %s69 = sadd.s32 1, %s65
              $region45: #{reverse} parent=38 // loop_footer_branch
                %64 = sbr.rel target = $region41
              $region46: #{reverse} parent=38 // loop_exit
                _
            $region39: #{reverse} parent=23 // pred_fallthru
              _
          $region24: #{reverse} parent=19 // pred_fallthru
            _
          // Predicated region
          $region25: #{reverse} parent=19 // pred_check
            _
          $region26: #{reverse} parent=19 // pred_check_branch
            %49 = sbr.rel (0) target = $region28
          $region27: #{reverse} parent=19 // pred_region
            loop: start=0, step=1, limit=1
            $region29: #{reverse} parent=27 // loop_pre_header
              _
            $region30: #{reverse} parent=27 // loop_header
              %s52 = sphi 0, %s56
              %p53 = scmp.ge.s32.totalorder %s52, 1
              %s57 = sphi %s43, %s43
              %s58 = sphi %s39, %s39
            $region31: #{reverse} parent=27 // loop_header_branch
              %55 = sbr.rel (%p53) target = $region35
            $region32: #{reverse} parent=27 // loop_body
              %v59 = vld [vmem:[%s57] sm:$0x1]
              %60 = vst [vmem:[%s58] sm:$0x1] %v59
            $region33: #{reverse} parent=27 // loop_footer
              %s56 = sadd.s32 1, %s52
            $region34: #{reverse} parent=27 // loop_footer_branch
              %51 = sbr.rel target = $region30
            $region35: #{reverse} parent=27 // loop_exit
              _
          $region28: #{reverse} parent=19 // pred_fallthru
            _
        $region20: #{reverse} parent=15 // pred_fallthru
          _
        %74 = vnop
      $region16: #{reverse} parent=5 // pred_fallthru
        _
      %p75 = scmp.le.s32.totalorder 1, %s6
      %p76 = scmp.lt.s32.totalorder %s6, 3
      %p77 = pnand %p75, %p76
      %p78 = pneg %p77
      // Predicated region
      $region47: #{reverse} parent=5 // pred_check
        _
      $region48: #{reverse} parent=5 // pred_check_branch
        %80 = sbr.rel (%p77) target = $region50
      $region49: #{reverse} parent=5 // pred_region
        %s81 = ssub.s32 %s6, 1
        %s82 = sand.u32 %s11, 1
        %s83 = sand.u32 %s11, 1
        %s84 = scalar_lea.vmem [#allocation1], %s83
        %s85 = sand.u32 %s11, 1
        %s86 = sand.u32 %s11, 1
        %s87 = scalar_lea.vmem [#allocation1], %s86
        %s88 = sand.u32 %s11, 1
        %s89 = sand.u32 %s11, 1
        %s90 = scalar_lea.vmem [#allocation3], %s89
        %s92 = smul.u32 1, 2
        %s93 = sshllo.u32 0, %s92
        %s94 = sshrl.u32 %s93, 1
        %s95 = sor.u32 %s93, %s94
        %s96 = sand.u32 %s95, 85
        %s97 = sshrl.u32 %s96, 1
        %s98 = sor.u32 %s96, %s97
        %s99 = sand.u32 51, %s98
        %s100 = sshrl.u32 %s99, 2
        %s101 = sor.u32 %s99, %s100
        %s102 = sand.u32 15, %s101
        %v103 = vld [vmem:[%s87] sm:%s102]
        %v104 = vunpack.c.l.bf16 %v103
        %v105 = vunpack.c.h.bf16 %v103
        %106 = vst [vmem:[#allocation0] sm:%s93] %v104
        %s107 = ssub.s32 1, %s16
        %v108 = vld [vmem:[#allocation0] sm:$0xff]
        %109 = vperm.xlu0 %4, %v108
        %v110 = vpop.permute.xlu0 %109
        %111 = vst [vmem:[#allocation2] sm:$0xff] %v110
        %s113 = smul.u32 1, 2
        %s114 = sshllo.u32 0, %s113
        %s115 = sshrl.u32 %s113, 1
        %v116 = vld [vmem:[#allocation2] sm:%s114]
        %v117 = vpack.c.bf16 0.0, %v116
        %s118 = sshllo.u32 0, %s115
        %119 = vst [vmem:[%s90] sm:%s118] %v117
        %s120 = sand.u32 %s11, 1
        %s121 = sand.u32 %s11, 1
        %s122 = scalar_lea.vmem [#allocation3], %s121
        %s123 = smul.addr %s15, 2
        %s124 = sadd.s32 %s16, %s123
        %s125 = scalar_lea.vmem %s1, %s124
        // Predicated region
        $region51: #{reverse} parent=49 // pred_check
          _
        $region52: #{reverse} parent=49 // pred_check_branch
          %127 = sbr.rel (0) target = $region54
        $region53: #{reverse} parent=49 // pred_region
          // Predicated region
          $region55: #{reverse} parent=53 // pred_check
            _
          $region56: #{reverse} parent=53 // pred_check_branch
            %129 = sbr.rel target = $region58
          $region57: #{reverse} parent=53 // pred_region
            // Predicated region
            $region70: #{reverse} parent=57 // pred_check
              _
            $region71: #{reverse} parent=57 // pred_check_branch
              %144 = sbr.rel (0) target = $region73
            $region72: #{reverse} parent=57 // pred_region
              loop: start=0, step=1, limit=1
              $region74: #{reverse} parent=72 // loop_pre_header
                _
              $region75: #{reverse} parent=72 // loop_header
                %s147 = sphi 0, %s151
                %p148 = scmp.ge.s32.totalorder %s147, 1
                %s152 = sphi %s122, %s122
                %s153 = sphi %s125, %s125
              $region76: #{reverse} parent=72 // loop_header_branch
                %150 = sbr.rel (%p148) target = $region80
              $region77: #{reverse} parent=72 // loop_body
                %v154 = vld [vmem:[%s152] sm:$0x1]
                %155 = vst [vmem:[%s153] sm:$0x1] %v154
              $region78: #{reverse} parent=72 // loop_footer
                %s151 = sadd.s32 1, %s147
              $region79: #{reverse} parent=72 // loop_footer_branch
                %146 = sbr.rel target = $region75
              $region80: #{reverse} parent=72 // loop_exit
                _
            $region73: #{reverse} parent=57 // pred_fallthru
              _
          $region58: #{reverse} parent=53 // pred_fallthru
            _
          // Predicated region
          $region59: #{reverse} parent=53 // pred_check
            _
          $region60: #{reverse} parent=53 // pred_check_branch
            %131 = sbr.rel (0) target = $region62
          $region61: #{reverse} parent=53 // pred_region
            loop: start=0, step=1, limit=1
            $region63: #{reverse} parent=61 // loop_pre_header
              _
            $region64: #{reverse} parent=61 // loop_header
              %s134 = sphi 0, %s138
              %p135 = scmp.ge.s32.totalorder %s134, 1
              %s139 = sphi %s122, %s122
              %s140 = sphi %s125, %s125
            $region65: #{reverse} parent=61 // loop_header_branch
              %137 = sbr.rel (%p135) target = $region69
            $region66: #{reverse} parent=61 // loop_body
              %v141 = vld [vmem:[%s139] sm:$0x1]
              %142 = vst [vmem:[%s140] sm:$0x1] %v141
            $region67: #{reverse} parent=61 // loop_footer
              %s138 = sadd.s32 1, %s134
            $region68: #{reverse} parent=61 // loop_footer_branch
              %133 = sbr.rel target = $region64
            $region69: #{reverse} parent=61 // loop_exit
              _
          $region62: #{reverse} parent=53 // pred_fallthru
            _
        $region54: #{reverse} parent=49 // pred_fallthru
          _
        %156 = vnop
      $region50: #{reverse} parent=5 // pred_fallthru
        _
      %p157 = scmp.le.s32.totalorder 2, %s6
      // Predicated region
      $region81: #{reverse} parent=5 // pred_check
        %p158 = pneg %p157
      $region82: #{reverse} parent=5 // pred_check_branch
        %160 = sbr.rel (%p158) target = $region84
      $region83: #{reverse} parent=5 // pred_region
        %s161 = ssub.s32 %s6, 2
        %s162 = sand.u32 %s12, 1
        %s163 = sand.u32 %s12, 1
        %s164 = scalar_lea.vmem [#allocation3], %s163
      $region84: #{reverse} parent=5 // pred_fallthru
        _
    $region6: #{reverse} parent=1 // loop_footer
      %s10 = sadd.s32 1, %s6
    $region7: #{reverse} parent=1 // loop_footer_branch
      %5 = sbr.rel target = $region3
    $region8: #{reverse} parent=1 // loop_exit
      _

</llo_original>
